<compile_context>
chip_gen: v6e
topology: v6e:2x2x1
jax: 0.10.0
libtpu: 0.0.40
codegen_flags: <defaults>
</compile_context>

<pallas_src>
import jax
import jax.numpy as jnp
from jax.experimental import pallas as pl
from jax.experimental.pallas import tpu as pltpu

LANE = 128  # TPU lane width; matmul feature dims are padded to this


def _round_up(x, m):
    return ((x + m - 1) // m) * m


def qnet_kernel(x_ref, w1_ref, b1_ref, w2_ref, b2_ref, o_ref):
    # One batch tile per grid step; weights/biases are VMEM-resident across
    # all steps (constant index_maps).
    A = o_ref.shape[-1]
    x = x_ref[...]                                                      # [TB, S]
    h = jnp.dot(x, w1_ref[...], preferred_element_type=jnp.float32)    # [TB, Hp] f32 acc
    h = jnp.maximum(h + b1_ref[...], 0.0)                              # bias+ReLU in f32 (VPU)
    # Second dot on the native MXU path: cast h down to the weight dtype
    # (bf16 x bf16 when compute_dtype=bf16; no-op in the f32 path).
    y = jnp.dot(h.astype(w2_ref.dtype), w2_ref[...],
                preferred_element_type=jnp.float32)                    # [TB, Ap] f32
    # Compact store: only the real A logit columns go back to HBM.
    o_ref[...] = (y[:, :A] + b2_ref[...]).astype(o_ref.dtype)          # [TB, A]


def prepare_params(w1, b1, w2, b2, *, compute_dtype=None):
    """One-time parameter prep (pad feature dims to full lanes, cast dtypes).

    w1: [S, H]  b1: [1, H] (or [H])   w2: [H, A]  b2: [1, A] (or [A])
    compute_dtype: optional dtype (e.g. jnp.bfloat16) for the HBM-facing
    matmul operands (x is cast per-call); accumulation and biases stay f32.

    Zero padding is exact: padded hidden units are relu(0 + 0) = 0 and the
    corresponding w2 rows are zero; padded action columns are never stored.
    """
    S, H = w1.shape
    A = w2.shape[-1]
    Hp = _round_up(max(H, 1), LANE)
    Ap = _round_up(max(A, 1), LANE)
    cdt = jnp.float32 if compute_dtype is None else compute_dtype

    w1p = jnp.pad(w1, ((0, 0), (0, Hp - H))).astype(cdt)                  # [S, Hp]
    b1p = jnp.pad(b1.reshape(1, H), ((0, 0), (0, Hp - H))).astype(jnp.float32)  # [1, Hp]
    w2p = jnp.pad(w2, ((0, Hp - H), (0, Ap - A))).astype(cdt)             # [Hp, Ap]
    b2p = b2.reshape(1, A).astype(jnp.float32)                            # [1, A] (unpadded)
    return (w1p, b1p, w2p, b2p)


def qnetwork_forward(x, params, *, block_b=2048):
    """Forward pass. x: [B, S] -> [B, A] f32 logits. params from prepare_params."""
    w1p, b1p, w2p, b2p = params
    B, S = x.shape
    assert S == w1p.shape[0], "x feature dim must match fc1 in_features"
    Hp = w1p.shape[1]
    Ap = w2p.shape[1]
    A = b2p.shape[1]
    cdt = w1p.dtype

    # Native sublane count for the compute dtype (keeps packed-row loads dense).
    sub = {4: 8, 2: 16, 1: 32}.get(jnp.dtype(cdt).itemsize, 8)

    # Batch tile: large by default (per-step overhead ~0.35 us), but capped so
    # the grid has >= 2 "parallel" steps whenever the batch allows it (v7x has
    # 2 TensorCores; no effect on v5e/v6e beyond one tiny extra step).
    B8 = _round_up(B, sub)
    half = _round_up(max(B8 // 2, sub), sub)
    TB = max(sub, min(_round_up(block_b, sub), half, B8))
    Bp = _round_up(B8, TB)

    xp = x.astype(cdt) if x.dtype != cdt else x
    if Bp != B:
        xp = jnp.pad(xp, ((0, Bp - B), (0, 0)))

    grid = (Bp // TB,)

    out = pl.pallas_call(
        qnet_kernel,
        out_shape=jax.ShapeDtypeStruct((Bp, A), jnp.float32),
        grid=grid,
        in_specs=[
            pl.BlockSpec((TB, S), lambda i: (i, 0)),    # x: tiled over batch
            pl.BlockSpec((S, Hp), lambda i: (0, 0)),    # w1: resident
            pl.BlockSpec((1, Hp), lambda i: (0, 0)),    # b1: resident
            pl.BlockSpec((Hp, Ap), lambda i: (0, 0)),   # w2: resident
            pl.BlockSpec((1, A), lambda i: (0, 0)),     # b2: resident (unpadded)
        ],
        out_specs=pl.BlockSpec((TB, A), lambda i: (i, 0)),  # compact logits
        compiler_params=pltpu.CompilerParams(
            dimension_semantics=("parallel",),  # batch tiles -> both TCs on v7x
        ),
    )(xp, w1p, b1p, w2p, b2p)

    return out[:B]


def init_params(key, num_states, num_actions, hidden=10):
    # Mimics PyTorch nn.Linear default init: U(-1/sqrt(fan_in), 1/sqrt(fan_in)).
    k1, k2, k3, k4 = jax.random.split(key, 4)
    bound1 = 1.0 / jnp.sqrt(jnp.float32(num_states))
    bound2 = 1.0 / jnp.sqrt(jnp.float32(hidden))
    w1 = jax.random.uniform(k1, (num_states, hidden), jnp.float32, -bound1, bound1)
    b1 = jax.random.uniform(k2, (1, hidden), jnp.float32, -bound1, bound1)
    w2 = jax.random.uniform(k3, (hidden, num_actions), jnp.float32, -bound2, bound2)
    b2 = jax.random.uniform(k4, (1, num_actions), jnp.float32, -bound2, bound2)
    return w1, b1, w2, b2


if __name__ == "__main__":
    num_states = 16   # e.g. one-hot inventory state
    num_actions = 4
    hidden = 10

    key = jax.random.PRNGKey(0)
    kx, kp, kx2 = jax.random.split(key, 3)
    w1, b1, w2, b2 = init_params(kp, num_states, num_actions, hidden)

    # Hoisted one-time param prep (f32 and bf16 variants).
    params_f32 = prepare_params(w1, b1, w2, b2)
    params_bf16 = prepare_params(w1, b1, w2, b2, compute_dtype=jnp.bfloat16)

    # --- case 1: small batch (single grid step), f32 path, tight check.
    batch = 8
    x = jax.random.normal(kx, (batch, num_states), jnp.float32)
    out = qnetwork_forward(x, params_f32)
    out = jax.block_until_ready(out)
    ref = jnp.maximum(x @ w1 + b1, 0.0) @ w2 + b2
    assert out.shape == (batch, num_actions)
    assert jnp.allclose(out, ref, atol=1e-5, rtol=1e-5)

    # --- case 2: non-tile-aligned batch with multiple grid steps (tests the
    # batch tiling / padding / compact-store path), still exact f32.
    batch2 = 40
    x2 = jax.random.normal(kx2, (batch2, num_states), jnp.float32)
    out2 = qnetwork_forward(x2, params_f32, block_b=16)
    out2 = jax.block_until_ready(out2)
    ref2 = jnp.maximum(x2 @ w1 + b1, 0.0) @ w2 + b2
    assert out2.shape == (batch2, num_actions)
    assert jnp.allclose(out2, ref2, atol=1e-5, rtol=1e-5)

    # --- case 3: bf16 HBM-facing operands (native MXU path on v5e/v6e/v7x),
    # f32 accumulation + f32 bias/ReLU epilogue, bf16 second-dot input.
    out3 = qnetwork_forward(x2, params_bf16, block_b=16)
    out3 = jax.block_until_ready(out3)
    assert out3.shape == (batch2, num_actions)
    assert jnp.allclose(out3, ref2, atol=5e-2, rtol=5e-2)

    # --- case 4: default (large) tile path on a bigger batch, f32 exact.
    batch3 = 3000
    x3 = jax.random.normal(kx, (batch3, num_states), jnp.float32)
    out4 = qnetwork_forward(x3, params_f32)
    out4 = jax.block_until_ready(out4)
    ref4 = jnp.maximum(x3 @ w1 + b1, 0.0) @ w2 + b2
    assert out4.shape == (batch3, num_actions)
    assert jnp.allclose(out4, ref4, atol=1e-5, rtol=1e-5)

    print("KERNEL_OK")
</pallas_src>

<mosaic_0001>
module attributes {stable_mosaic.version = 11 : i64} {
  func.func @qnet_kernel(%arg0: i32, %arg1: memref<8x16xf32, #tpu.memory_space<vmem>>, %arg2: memref<16x128xf32, #tpu.memory_space<vmem>>, %arg3: memref<1x128xf32, #tpu.memory_space<vmem>>, %arg4: memref<128x128xf32, #tpu.memory_space<vmem>>, %arg5: memref<1x4xf32, #tpu.memory_space<vmem>>, %arg6: memref<8x4xf32, #tpu.memory_space<vmem>>) attributes {dimension_semantics = [#tpu.dimension_semantics<parallel>], iteration_bounds = array<i64: 1>, scalar_prefetch = 0 : i64, scratch_operands = 0 : i64, tpu.core_type = #tpu.core_type<tc>, window_params = [{transform_indices = @transform_0, window_bounds = array<i64: 8, 16>}, {pipeline_mode = #tpu.pipeline_mode<synchronous>, transform_indices = @transform_1, window_bounds = array<i64: 16, 128>}, {pipeline_mode = #tpu.pipeline_mode<synchronous>, transform_indices = @transform_2, window_bounds = array<i64: 1, 128>}, {pipeline_mode = #tpu.pipeline_mode<synchronous>, transform_indices = @transform_3, window_bounds = array<i64: 128, 128>}, {pipeline_mode = #tpu.pipeline_mode<synchronous>, transform_indices = @transform_4, window_bounds = array<i64: 1, 4>}, {transform_indices = @transform_5, window_bounds = array<i64: 8, 4>}]} {
    %c0 = arith.constant 0 : index
    %c0_0 = arith.constant 0 : index
    %0 = vector.load %arg1[%c0, %c0_0] : memref<8x16xf32, #tpu.memory_space<vmem>>, vector<8x16xf32>
    %c0_1 = arith.constant 0 : index
    %c0_2 = arith.constant 0 : index
    %1 = vector.load %arg2[%c0_1, %c0_2] : memref<16x128xf32, #tpu.memory_space<vmem>>, vector<16x128xf32>
    %cst = arith.constant dense<0.000000e+00> : vector<8x128xf32>
    %2 = tpu.matmul %0, %1, %cst {dimension_numbers = #tpu.dot_dimension_numbers<[1], [0], [0], [1], [0, 0, 1, 1], [], []>} : vector<8x16xf32>, vector<16x128xf32>, vector<8x128xf32> -> vector<8x128xf32>
    %c0_3 = arith.constant 0 : index
    %c0_4 = arith.constant 0 : index
    %3 = vector.load %arg3[%c0_3, %c0_4] : memref<1x128xf32, #tpu.memory_space<vmem>>, vector<1x128xf32>
    %4 = vector.broadcast %3 : vector<1x128xf32> to vector<8x128xf32>
    %5 = arith.addf %2, %4 : vector<8x128xf32>
    %cst_5 = arith.constant 0.000000e+00 : f32
    %6 = vector.broadcast %cst_5 : f32 to vector<8x128xf32>
    %7 = arith.maximumf %5, %6 : vector<8x128xf32>
    %c0_6 = arith.constant 0 : index
    %c0_7 = arith.constant 0 : index
    %8 = vector.load %arg4[%c0_6, %c0_7] : memref<128x128xf32, #tpu.memory_space<vmem>>, vector<128x128xf32>
    %cst_8 = arith.constant dense<0.000000e+00> : vector<8x128xf32>
    %9 = tpu.matmul %7, %8, %cst_8 {dimension_numbers = #tpu.dot_dimension_numbers<[1], [0], [0], [1], [0, 0, 1, 1], [], []>} : vector<8x128xf32>, vector<128x128xf32>, vector<8x128xf32> -> vector<8x128xf32>
    %10 = vector.extract_strided_slice %9 {offsets = [0, 0], sizes = [8, 4], strides = [1, 1]} : vector<8x128xf32> to vector<8x4xf32>
    %c0_9 = arith.constant 0 : index
    %c0_10 = arith.constant 0 : index
    %11 = vector.load %arg5[%c0_9, %c0_10] : memref<1x4xf32, #tpu.memory_space<vmem>>, vector<1x4xf32>
    %12 = vector.broadcast %11 : vector<1x4xf32> to vector<8x4xf32>
    %13 = arith.addf %10, %12 : vector<8x4xf32>
    %c0_11 = arith.constant 0 : index
    %c0_12 = arith.constant 0 : index
    %14 = vector.load %arg6[%c0_11, %c0_12] : memref<8x4xf32, #tpu.memory_space<vmem>>, vector<8x4xf32>
    tpu.vector_store %arg6[%c0_11, %c0_12], %13 {strides = array<i32>} : memref<8x4xf32, #tpu.memory_space<vmem>>, vector<8x4xf32>,
    return
  }
  func.func @transform_0(%arg0: i32) -> (i32, i32) {
    %c0_i32 = arith.constant 0 : i32
    %c0_i32_0 = arith.constant 0 : i32
    return %arg0, %c0_i32 : i32, i32
  }
  func.func @transform_1(%arg0: i32) -> (i32, i32) {
    %c0_i32 = arith.constant 0 : i32
    %c0_i32_0 = arith.constant 0 : i32
    %c0_i32_1 = arith.constant 0 : i32
    return %c0_i32, %c0_i32_0 : i32, i32
  }
  func.func @transform_2(%arg0: i32) -> (i32, i32) {
    %c0_i32 = arith.constant 0 : i32
    %c0_i32_0 = arith.constant 0 : i32
    %c0_i32_1 = arith.constant 0 : i32
    return %c0_i32, %c0_i32_0 : i32, i32
  }
  func.func @transform_3(%arg0: i32) -> (i32, i32) {
    %c0_i32 = arith.constant 0 : i32
    %c0_i32_0 = arith.constant 0 : i32
    %c0_i32_1 = arith.constant 0 : i32
    return %c0_i32, %c0_i32_0 : i32, i32
  }
  func.func @transform_4(%arg0: i32) -> (i32, i32) {
    %c0_i32 = arith.constant 0 : i32
    %c0_i32_0 = arith.constant 0 : i32
    %c0_i32_1 = arith.constant 0 : i32
    return %c0_i32, %c0_i32_0 : i32, i32
  }
  func.func @transform_5(%arg0: i32) -> (i32, i32) {
    %c0_i32 = arith.constant 0 : i32
    %c0_i32_0 = arith.constant 0 : i32
    return %arg0, %c0_i32 : i32, i32
  }
}

</mosaic_0001>

<llo_original>
// kernel: tpu_custom_call.1
$region0: #{tpu_custom_call.1}
  #allocation0 [shape = 'u32[]', space=smem, size = 0x4, offset = 0x4, fixed_abs, tag = 'smem constant byte address 0x4 - core index']
  #allocation1 [shape = 'u32[144,128]{1,0:T(1,128)}', space=vmem, size = 0x12000, scoped, tag = 'internal scratch']
  %s0 = inlined_call_operand.hbm [shape: f32[8,16], index: 0, kind: input, shape index: {}]
  %s1 = inlined_call_operand.hbm [shape: f32[16,128], index: 1, kind: input, shape index: {}]
  %s2 = inlined_call_operand.vmem [shape: f32[1,128], index: 2, kind: input, shape index: {}]
  %s3 = inlined_call_operand.hbm [shape: f32[128,128], index: 3, kind: input, shape index: {}]
  %s4 = inlined_call_operand.vmem [shape: f32[1,4], index: 4, kind: input, shape index: {}]
  %s5 = inlined_call_operand.vmem [shape: f32[8,4], index: 5, kind: output, shape index: {}]
  %s6 = sld [smem:[#allocation0]]
  $region42: #{tpu_custom_call.1} parent=0
    _
  %s8 = ssub.s32 1, %s6
  %s9 = scalar_select 0, %s8, %s6
  $region1: #{tpu_custom_call.1} parent=0
    #allocation2 [shape = 'u8[4096]{0}', space=vmem, size = 0x1000, scoped, tag = 'input window, operand 0, single buffered']
    #allocation3 [shape = 's32[1]{0}', space=sflag, size = 0x4, scoped, tag = 'scoped memory for tpu_custom_call.1']
    #allocation4 [shape = 'u8[8192]{0}', space=vmem, size = 0x2000, scoped, tag = 'input window, operand 1, single buffered']
    #allocation5 [shape = 's32[1]{0}', space=sflag, size = 0x4, scoped, tag = 'scoped memory for tpu_custom_call.1']
    #allocation6 [shape = 'u8[65536]{0}', space=vmem, size = 0x10000, scoped, tag = 'input window, operand 3, single buffered']
    %10 = vsyncpa [#allocation3], 0
    %11 = vsyncpa [#allocation5], 0
    // Predicated region
    $region2: #{tpu_custom_call.1} parent=1 // pred_check
      _
    $region3: #{tpu_custom_call.1} parent=1 // pred_check_branch
      %13 = sbr.rel (0) target = $region5
    $region4: #{tpu_custom_call.1} parent=1 // pred_region
      %s15 = ssub.s32 128, 128
      %16 = vsyncadd [#allocation3], %s15
      %s18 = sshll.u32 [#allocation2], 4
      %s19 = int_to_ptr.vmem [resolvable:$true] %s18
      %21 = dma.hbm_to_vmem [thread:$0]  %s0, 128, %s19, [#allocation3]
    $region5: #{tpu_custom_call.1} parent=1 // pred_fallthru
      _
    // Predicated region
    $region6: #{tpu_custom_call.1} parent=1 // pred_check
      _
    $region7: #{tpu_custom_call.1} parent=1 // pred_check_branch
      %23 = sbr.rel (0) target = $region9
    $region8: #{tpu_custom_call.1} parent=1 // pred_region
      %s25 = ssub.s32 256, 256
      %26 = vsyncadd [#allocation5], %s25
      %s27 = sshll.u32 [#allocation4], 4
      %s28 = int_to_ptr.vmem [resolvable:$true] %s27
      %33 = dma.hbm_to_vmem [thread:$0]  %s1, 256, %s28, [#allocation5], 128, 128, 8
    $region9: #{tpu_custom_call.1} parent=1 // pred_fallthru
      _
    // Predicated region
    $region10: #{tpu_custom_call.1} parent=1 // pred_check
      _
    $region11: #{tpu_custom_call.1} parent=1 // pred_check_branch
      %35 = sbr.rel (0) target = $region13
    $region12: #{tpu_custom_call.1} parent=1 // pred_region
      _
    $region13: #{tpu_custom_call.1} parent=1 // pred_fallthru
      _
    // Predicated region
    $region14: #{tpu_custom_call.1} parent=1 // pred_check
      _
    $region15: #{tpu_custom_call.1} parent=1 // pred_check_branch
      %37 = sbr.rel (0) target = $region17
    $region16: #{tpu_custom_call.1} parent=1 // pred_region
      %s39 = ssub.s32 2048, 2048
      %40 = vsyncadd [#allocation5], %s39
      %s41 = sshll.u32 [#allocation6], 4
      %s42 = int_to_ptr.vmem [resolvable:$true] %s41
      %47 = dma.hbm_to_vmem [thread:$0]  %s3, 2048, %s42, [#allocation5], 128, 128, 8
    $region17: #{tpu_custom_call.1} parent=1 // pred_fallthru
      _
    // Predicated region
    $region18: #{tpu_custom_call.1} parent=1 // pred_check
      _
    $region19: #{tpu_custom_call.1} parent=1 // pred_check_branch
      %49 = sbr.rel (0) target = $region21
    $region20: #{tpu_custom_call.1} parent=1 // pred_region
      _
    $region21: #{tpu_custom_call.1} parent=1 // pred_fallthru
      _
    // Predicated region
    $region22: #{tpu_custom_call.1} parent=1 // pred_check
      _
    $region23: #{tpu_custom_call.1} parent=1 // pred_check_branch
      %51 = sbr.rel (0) target = $region25
    $region24: #{tpu_custom_call.1} parent=1 // pred_region
      %52 = dma.done [#allocation3], 128
    $region25: #{tpu_custom_call.1} parent=1 // pred_fallthru
      _
    // Predicated region
    $region26: #{tpu_custom_call.1} parent=1 // pred_check
      _
    $region27: #{tpu_custom_call.1} parent=1 // pred_check_branch
      %54 = sbr.rel (0) target = $region29
    $region28: #{tpu_custom_call.1} parent=1 // pred_region
      %55 = dma.done [#allocation5], 256
    $region29: #{tpu_custom_call.1} parent=1 // pred_fallthru
      _
    // Predicated region
    $region30: #{tpu_custom_call.1} parent=1 // pred_check
      _
    $region31: #{tpu_custom_call.1} parent=1 // pred_check_branch
      %57 = sbr.rel (0) target = $region33
    $region32: #{tpu_custom_call.1} parent=1 // pred_region
      %58 = dma.done [#allocation5], 2048
    $region33: #{tpu_custom_call.1} parent=1 // pred_fallthru
      _
    %v59 = vld [vmem:[#allocation2] sm:$0xff]
    %v60 = vld [vmem:[#allocation4] sm:$0xff]
    %v61 = vld [vmem:[#allocation4 + $0x8] sm:$0xff]
    %v62 = vld [vmem:[%s2] sm:$0x1]
    %v64 = vlaneseq
    %v65 = vshrl.u32 %v64, 7
    %v66 = vsub.s32 0, %v65
    %v67 = vrot.slane %v62, %v66
    %vm69 = vcmask 130048
    %v71 = vsel %vm69, %v59, 0
    %73 = vmatprep.subr.mxu0 0.0
    %74 = vmatpush1.msra.mxu0 0.0
    %75 = vmatprep.subr.mxu0 0.0
    %76 = vmatpush1.msra.mxu0 0.0
    %77 = vmatprep.subr.mxu0 0.0
    %78 = vmatpush1.msra.mxu0 0.0
    %79 = vmatprep.subr.mxu0 0.0
    %80 = vmatpush1.msra.mxu0 0.0
    %81 = vmatprep.subr.mxu0 0.0
    %82 = vmatpush1.msra.mxu0 0.0
    %83 = vmatprep.subr.mxu0 0.0
    %84 = vmatpush1.msra.mxu0 0.0
    %85 = vmatprep.subr.mxu0 0.0
    %86 = vmatpush1.msra.mxu0 0.0
    %87 = vmatprep.subr.mxu0 0.0
    %88 = vmatpush1.msra.mxu0 0.0
    %89 = vmatprep.subr.mxu0 0.0
    %90 = vmatpush1.msra.mxu0 0.0
    %91 = vmatprep.subr.mxu0 0.0
    %92 = vmatpush1.msra.mxu0 0.0
    %93 = vmatprep.subr.mxu0 0.0
    %94 = vmatpush1.msra.mxu0 0.0
    %95 = vmatprep.subr.mxu0 0.0
    %96 = vmatpush1.msra.mxu0 0.0
    %97 = vmatprep.subr.mxu0 0.0
    %98 = vmatpush1.msra.mxu0 0.0
    %99 = vmatprep.subr.mxu0 0.0
    %100 = vmatpush1.msra.mxu0 0.0
    %101 = vmatprep.subr.mxu0 0.0
    %102 = vmatpush1.msra.mxu0 %v61
    %103 = vmatprep.subr.mxu0 0.0
    %104 = vmatpush1.msra.mxu0 %v60
    %105 = vmatprep.subr.mxu0 0.0
    %106 = vmatpush2.msra.mxu0 0.0
    %107 = vmatprep.subr.mxu0 0.0
    %108 = vmatpush2.msra.mxu0 0.0
    %109 = vmatprep.subr.mxu0 0.0
    %110 = vmatpush2.msra.mxu0 0.0
    %111 = vmatprep.subr.mxu0 0.0
    %112 = vmatpush2.msra.mxu0 0.0
    %113 = vmatprep.subr.mxu0 0.0
    %114 = vmatpush2.msra.mxu0 0.0
    %115 = vmatprep.subr.mxu0 0.0
    %116 = vmatpush2.msra.mxu0 0.0
    %117 = vmatprep.subr.mxu0 0.0
    %118 = vmatpush2.msra.mxu0 0.0
    %119 = vmatprep.subr.mxu0 0.0
    %120 = vmatpush2.msra.mxu0 0.0
    %121 = vmatprep.subr.mxu0 0.0
    %122 = vmatpush2.msra.mxu0 0.0
    %123 = vmatprep.subr.mxu0 0.0
    %124 = vmatpush2.msra.mxu0 0.0
    %125 = vmatprep.subr.mxu0 0.0
    %126 = vmatpush2.msra.mxu0 0.0
    %127 = vmatprep.subr.mxu0 0.0
    %128 = vmatpush2.msra.mxu0 0.0
    %129 = vmatprep.subr.mxu0 0.0
    %130 = vmatpush2.msra.mxu0 0.0
    %131 = vmatprep.subr.mxu0 0.0
    %132 = vmatpush2.msra.mxu0 0.0
    %133 = vmatprep.subr.mxu0 0.0
    %134 = vmatpush2.msra.mxu0 0.0
    %135 = vmatprep.subr.mxu0 0.0
    %136 = vmatpush2.msra.mxu0 0.0
    %137 = vmatprep.mubr.f32.mxu0 0.0
    %138 = vmatmul.mubr.f32.gmra.mxu0 %v71
    %v139 = vpop.f32.mrf.mxu0
    %v140 = vadd.f32 %v67, %v139
    %v141 = vpop.f32.mrf.mxu0
    %142 = vdwg.mxu0
    %v143 = vmax.f32 %v140, 0.0
    %v144 = vld [vmem:[#allocation6] sm:$0xff]
    %v145 = vld [vmem:[#allocation6 + $0x8] sm:$0xff]
    %v146 = vld [vmem:[#allocation6 + $0x10] sm:$0xff]
    %v147 = vld [vmem:[#allocation6 + $0x18] sm:$0xff]
    %v148 = vld [vmem:[#allocation6 + $0x20] sm:$0xff]
    %v149 = vld [vmem:[#allocation6 + $0x28] sm:$0xff]
    %v150 = vld [vmem:[#allocation6 + $0x30] sm:$0xff]
    %v151 = vld [vmem:[#allocation6 + $0x38] sm:$0xff]
    %v152 = vld [vmem:[#allocation6 + $0x40] sm:$0xff]
    %v153 = vld [vmem:[#allocation6 + $0x48] sm:$0xff]
    %v154 = vld [vmem:[#allocation6 + $0x50] sm:$0xff]
    %v155 = vld [vmem:[#allocation6 + $0x58] sm:$0xff]
    %v156 = vld [vmem:[#allocation6 + $0x60] sm:$0xff]
    %v157 = vld [vmem:[#allocation6 + $0x68] sm:$0xff]
    %v158 = vld [vmem:[#allocation6 + $0x70] sm:$0xff]
    %v159 = vld [vmem:[#allocation6 + $0x78] sm:$0xff]
    %160 = vmatprep.subr.mxu0 0.0
    %161 = vmatpush1.msra.mxu0 %v159
    %162 = vmatprep.subr.mxu0 0.0
    %163 = vmatpush1.msra.mxu0 %v158
    %164 = vmatprep.subr.mxu0 0.0
    %165 = vmatpush1.msra.mxu0 %v157
    %166 = vmatprep.subr.mxu0 0.0
    %167 = vmatpush1.msra.mxu0 %v156
    %168 = vmatprep.subr.mxu0 0.0
    %169 = vmatpush1.msra.mxu0 %v155
    %170 = vmatprep.subr.mxu0 0.0
    %171 = vmatpush1.msra.mxu0 %v154
    %172 = vmatprep.subr.mxu0 0.0
    %173 = vmatpush1.msra.mxu0 %v153
    %174 = vmatprep.subr.mxu0 0.0
    %175 = vmatpush1.msra.mxu0 %v152
    %176 = vmatprep.subr.mxu0 0.0
    %177 = vmatpush1.msra.mxu0 %v151
    %178 = vmatprep.subr.mxu0 0.0
    %179 = vmatpush1.msra.mxu0 %v150
    %180 = vmatprep.subr.mxu0 0.0
    %181 = vmatpush1.msra.mxu0 %v149
    %182 = vmatprep.subr.mxu0 0.0
    %183 = vmatpush1.msra.mxu0 %v148
    %184 = vmatprep.subr.mxu0 0.0
    %185 = vmatpush1.msra.mxu0 %v147
    %186 = vmatprep.subr.mxu0 0.0
    %187 = vmatpush1.msra.mxu0 %v146
    %188 = vmatprep.subr.mxu0 0.0
    %189 = vmatpush1.msra.mxu0 %v145
    %190 = vmatprep.subr.mxu0 0.0
    %191 = vmatpush1.msra.mxu0 %v144
    %192 = vmatprep.subr.mxu0 0.0
    %193 = vmatpush2.msra.mxu0 0.0
    %194 = vmatprep.subr.mxu0 0.0
    %195 = vmatpush2.msra.mxu0 0.0
    %196 = vmatprep.subr.mxu0 0.0
    %197 = vmatpush2.msra.mxu0 0.0
    %198 = vmatprep.subr.mxu0 0.0
    %199 = vmatpush2.msra.mxu0 0.0
    %200 = vmatprep.subr.mxu0 0.0
    %201 = vmatpush2.msra.mxu0 0.0
    %202 = vmatprep.subr.mxu0 0.0
    %203 = vmatpush2.msra.mxu0 0.0
    %204 = vmatprep.subr.mxu0 0.0
    %205 = vmatpush2.msra.mxu0 0.0
    %206 = vmatprep.subr.mxu0 0.0
    %207 = vmatpush2.msra.mxu0 0.0
    %208 = vmatprep.subr.mxu0 0.0
    %209 = vmatpush2.msra.mxu0 0.0
    %210 = vmatprep.subr.mxu0 0.0
    %211 = vmatpush2.msra.mxu0 0.0
    %212 = vmatprep.subr.mxu0 0.0
    %213 = vmatpush2.msra.mxu0 0.0
    %214 = vmatprep.subr.mxu0 0.0
    %215 = vmatpush2.msra.mxu0 0.0
    %216 = vmatprep.subr.mxu0 0.0
    %217 = vmatpush2.msra.mxu0 0.0
    %218 = vmatprep.subr.mxu0 0.0
    %219 = vmatpush2.msra.mxu0 0.0
    %220 = vmatprep.subr.mxu0 0.0
    %221 = vmatpush2.msra.mxu0 0.0
    %222 = vmatprep.subr.mxu0 0.0
    %223 = vmatpush2.msra.mxu0 0.0
    %224 = vmatprep.mubr.f32.mxu0 0.0
    %225 = vmatmul.mubr.f32.gmra.mxu0 %v143
    %v226 = vpop.f32.mrf.mxu0
    %v227 = vadd.f32 0.0, %v226
    %v228 = vpop.f32.mrf.mxu0
    %229 = vdwg.mxu0
    %v230 = vld [vmem:[%s4] sm:$0x1]
    %v232 = vlaneseq
    %v233 = vshrl.u32 %v232, 7
    %v234 = vsub.s32 0, %v233
    %v235 = vrot.slane %v230, %v234
    %v237 = vadd.f32 %v227, %v235
    %vm238 = vcmask 31744
    %239 = vst.msk [vmem:[%s5] sm:$0xff] %vm238, %v237
    // Predicated region
    $region34: #{tpu_custom_call.1} parent=1 // pred_check
      _
    $region35: #{tpu_custom_call.1} parent=1 // pred_check_branch
      %241 = sbr.rel (0) target = $region37
    $region36: #{tpu_custom_call.1} parent=1 // pred_region
      _
    $region37: #{tpu_custom_call.1} parent=1 // pred_fallthru
      _
    // Predicated region
    $region38: #{tpu_custom_call.1} parent=1 // pred_check
      _
    $region39: #{tpu_custom_call.1} parent=1 // pred_check_branch
      %243 = sbr.rel (0) target = $region41
    $region40: #{tpu_custom_call.1} parent=1 // pred_region
      _
    $region41: #{tpu_custom_call.1} parent=1 // pred_fallthru
      _
    %244 = vsyncpa [#allocation3], 1
    %245 = vsyncpa [#allocation5], 1

</llo_original>
